<compile_context>
chip_gen: v7x
topology: tpu7x:2x2x1
jax: 0.10.0
libtpu: 0.0.40
codegen_flags: <defaults>
</compile_context>

<pallas_src>
import jax
import jax.numpy as jnp
from jax.experimental import pallas as pl
from jax.experimental.pallas import tpu as pltpu


def _round_up(x, m):
    return ((x + m - 1) // m) * m


# ----------------------------------------------------------------------------
# Fused kernel: 4 chained single-step LSTM cells, packed weight/bias slabs.
# ----------------------------------------------------------------------------
def _make_fused_kernel(d_ins, hs):
    """d_ins / hs: static per-layer input widths / hidden sizes (4 layers)."""

    def kernel(x_ref, w_ref, b_ref, out_ref):
        h = x_ref[...]                                  # (B_tile, input_size)
        for l in range(4):
            d_in, H = d_ins[l], hs[l]
            # Static views into the packed slabs (padding rows/cols are zero).
            w_full = w_ref[l]                           # (D_pad, G_pad)
            w = w_full[:d_in, :]                        # (d_in, G_pad)
            gates = jnp.dot(h, w, preferred_element_type=jnp.float32) + b_ref[l]
            # Gate columns packed contiguously as [i, g, o] (dead f dropped).
            i = jax.nn.sigmoid(gates[:, 0:H])
            g = jnp.tanh(gates[:, H:2 * H])
            o = jax.nn.sigmoid(gates[:, 2 * H:3 * H])
            # h0 = c0 = 0  =>  h0 @ W_hh == 0 and f * c0 == 0, so c = i * g.
            h = o * jnp.tanh(i * g)
        out_ref[...] = h.astype(out_ref.dtype)

    return kernel


# ----------------------------------------------------------------------------
# Parameter init (matches nn.LSTM shapes; uniform(-1/sqrt(H), 1/sqrt(H))) and
# host-side packing into two slabs.
# ----------------------------------------------------------------------------
def init_params(key, input_size, hidden_size):
    layer_dims = [
        (input_size, hidden_size),    # encoder layer 0
        (hidden_size, hidden_size),   # encoder layer 1
        (hidden_size, input_size),    # decoder layer 0
        (input_size, input_size),     # decoder layer 1
    ]
    d_pad = _round_up(max(d for d, _ in layer_dims), 8)
    g_pad = _round_up(3 * max(h for _, h in layer_dims), 128)

    w_slab = jnp.zeros((4, d_pad, g_pad), jnp.float32)
    b_slab = jnp.zeros((4, 1, g_pad), jnp.float32)
    raw = []

    keys = jax.random.split(key, 4)
    for l, ((d_in, h), k) in enumerate(zip(layer_dims, keys)):
        bound = 1.0 / (h ** 0.5)
        k1, k2, k3, k4 = jax.random.split(k, 4)
        # torch nn.LSTM layouts; gate row order i, f, g, o.
        w_ih = jax.random.uniform(k1, (4 * h, d_in), jnp.float32, -bound, bound)
        w_hh = jax.random.uniform(k2, (4 * h, h), jnp.float32, -bound, bound)
        b_ih = jax.random.uniform(k3, (4 * h,), jnp.float32, -bound, bound)
        b_hh = jax.random.uniform(k4, (4 * h,), jnp.float32, -bound, bound)
        del w_hh  # dead: single step with zero hidden state
        raw.append(dict(w_ih=w_ih, b_ih=b_ih, b_hh=b_hh, h=h))

        # Keep only the live gates [i, g, o] (f is multiplied by c0 == 0),
        # transpose to (d_in, 3h) for lane-dense x @ W, combine both biases.
        live_w = jnp.concatenate(
            [w_ih[0:h], w_ih[2 * h:3 * h], w_ih[3 * h:4 * h]], axis=0)   # (3h, d_in)
        bias = b_ih + b_hh
        live_b = jnp.concatenate(
            [bias[0:h], bias[2 * h:3 * h], bias[3 * h:4 * h]])           # (3h,)

        w_slab = w_slab.at[l, :d_in, :3 * h].set(live_w.T)
        b_slab = b_slab.at[l, 0, :3 * h].set(live_b)

    return dict(
        w=w_slab,
        b=b_slab,
        d_ins=tuple(d for d, _ in layer_dims),
        hs=tuple(h for _, h in layer_dims),
        raw=raw,
    )


# ----------------------------------------------------------------------------
# Forward pass.  Small batches: one grid-free fused call (3 input DMAs).
# Large batches: 1-D parallel grid over batch tiles (weights stay resident).
# ----------------------------------------------------------------------------
def lstm_autoencoder_brake_forward(x, params, *, batch_tile=512):
    B = x.shape[0]
    h = x.reshape(B, -1).astype(jnp.float32)       # view(len(x), 1, -1); seq dim dropped

    d_ins, hs = params["d_ins"], params["hs"]
    out_size = hs[-1]
    w_slab, b_slab = params["w"], params["b"]
    kernel = _make_fused_kernel(d_ins, hs)

    if B <= batch_tile:
        # Whole-array VMEM blocks (exempt from (8,128) divisibility); no grid,
        # no wrapper pad/slice.
        vmem = pl.BlockSpec(memory_space=pltpu.MemorySpace.VMEM)
        return pl.pallas_call(
            kernel,
            out_shape=jax.ShapeDtypeStruct((B, out_size), jnp.float32),
            in_specs=[vmem, vmem, vmem],
            out_specs=vmem,
        )(h, w_slab, b_slab)

    # Batch-tiled path: parallel grid over batch (uses both TCs on v7x);
    # weight/bias slabs map to block 0 every step so they are not re-fetched.
    tb = batch_tile
    return pl.pallas_call(
        kernel,
        out_shape=jax.ShapeDtypeStruct((B, out_size), jnp.float32),
        grid_spec=pltpu.PrefetchScalarGridSpec(
            num_scalar_prefetch=0,
            grid=(pl.cdiv(B, tb),),
            in_specs=[
                pl.BlockSpec((tb, d_ins[0]), lambda i: (i, 0)),
                pl.BlockSpec(w_slab.shape, lambda i: (0, 0, 0)),
                pl.BlockSpec(b_slab.shape, lambda i: (0, 0, 0)),
            ],
            out_specs=pl.BlockSpec((tb, out_size), lambda i: (i, 0)),
        ),
        compiler_params=pltpu.CompilerParams(
            dimension_semantics=("parallel",)),
    )(h, w_slab, b_slab)


# ----------------------------------------------------------------------------
# Pure-JAX reference using the RAW torch-layout weights (full i,f,g,o gates,
# zero initial states) — checks both the packing and the f-gate elision.
# ----------------------------------------------------------------------------
def _forward_ref(x, params):
    h = x.reshape(x.shape[0], -1).astype(jnp.float32)
    for lp in params["raw"]:
        H = lp["h"]
        gates = h @ lp["w_ih"].T + lp["b_ih"] + lp["b_hh"]   # h0 @ W_hh == 0
        i = jax.nn.sigmoid(gates[:, 0:H])
        f = jax.nn.sigmoid(gates[:, H:2 * H])
        g = jnp.tanh(gates[:, 2 * H:3 * H])
        o = jax.nn.sigmoid(gates[:, 3 * H:4 * H])
        c = f * 0.0 + i * g                                  # c0 == 0
        h = o * jnp.tanh(c)
    return h


if __name__ == "__main__":
    input_size = 16
    hidden_size = 32
    batch_size = 4

    key = jax.random.PRNGKey(0)
    k_x, k_p, k_x2 = jax.random.split(key, 3)
    params = init_params(k_p, input_size, hidden_size)

    # Small batch: single grid-free fused call.
    x = jax.random.normal(k_x, (batch_size, input_size), jnp.float32)
    out = jax.block_until_ready(lstm_autoencoder_brake_forward(x, params))
    ref = jax.block_until_ready(_forward_ref(x, params))
    assert out.shape == (batch_size, input_size)
    assert jnp.allclose(out, ref, atol=1e-5, rtol=1e-5)

    # Larger batch: exercise the batch-tiled parallel-grid path.
    x2 = jax.random.normal(k_x2, (24, input_size), jnp.float32)
    out2 = jax.block_until_ready(
        lstm_autoencoder_brake_forward(x2, params, batch_tile=8))
    ref2 = jax.block_until_ready(_forward_ref(x2, params))
    assert out2.shape == (24, input_size)
    assert jnp.allclose(out2, ref2, atol=1e-5, rtol=1e-5)

    print("KERNEL_OK")
</pallas_src>

<mosaic_0001>
module attributes {stable_mosaic.version = 11 : i64} {
  func.func @kernel(%arg0: memref<4x16xf32, #tpu.memory_space<vmem>>, %arg1: memref<4x32x128xf32, #tpu.memory_space<vmem>>, %arg2: memref<4x1x128xf32, #tpu.memory_space<vmem>>, %arg3: memref<4x16xf32, #tpu.memory_space<vmem>>) attributes {dimension_semantics = [], scalar_prefetch = 0 : i64, scratch_operands = 0 : i64, tpu.core_type = #tpu.core_type<tc>} {
    %c0 = arith.constant 0 : index
    %c0_0 = arith.constant 0 : index
    %0 = vector.load %arg0[%c0, %c0_0] : memref<4x16xf32, #tpu.memory_space<vmem>>, vector<4x16xf32>
    %c0_1 = arith.constant 0 : index
    %c0_2 = arith.constant 0 : index
    %c0_3 = arith.constant 0 : index
    %1 = vector.load %arg1[%c0_1, %c0_2, %c0_3] : memref<4x32x128xf32, #tpu.memory_space<vmem>>, vector<1x32x128xf32>
    %2 = vector.shape_cast %1 : vector<1x32x128xf32> to vector<32x128xf32>
    %3 = vector.extract_strided_slice %2 {offsets = [0, 0], sizes = [16, 128], strides = [1, 1]} : vector<32x128xf32> to vector<16x128xf32>
    %cst = arith.constant dense<0.000000e+00> : vector<4x128xf32>
    %4 = tpu.matmul %0, %3, %cst {dimension_numbers = #tpu.dot_dimension_numbers<[1], [0], [0], [1], [0, 0, 1, 1], [], []>} : vector<4x16xf32>, vector<16x128xf32>, vector<4x128xf32> -> vector<4x128xf32>
    %c0_4 = arith.constant 0 : index
    %c0_5 = arith.constant 0 : index
    %c0_6 = arith.constant 0 : index
    %5 = vector.load %arg2[%c0_4, %c0_5, %c0_6] : memref<4x1x128xf32, #tpu.memory_space<vmem>>, vector<1x1x128xf32>
    %6 = vector.shape_cast %5 : vector<1x1x128xf32> to vector<1x128xf32>
    %7 = vector.broadcast %6 : vector<1x128xf32> to vector<4x128xf32>
    %8 = arith.addf %4, %7 : vector<4x128xf32>
    %9 = vector.extract_strided_slice %8 {offsets = [0, 0], sizes = [4, 32], strides = [1, 1]} : vector<4x128xf32> to vector<4x32xf32>
    %10 = arith.negf %9 : vector<4x32xf32>
    %11 = math.exp %10 : vector<4x32xf32>
    %cst_7 = arith.constant 1.000000e+00 : f32
    %12 = vector.broadcast %cst_7 : f32 to vector<4x32xf32>
    %13 = arith.addf %12, %11 : vector<4x32xf32>
    %14 = arith.divf %12, %13 : vector<4x32xf32>
    %15 = vector.extract_strided_slice %8 {offsets = [0, 32], sizes = [4, 32], strides = [1, 1]} : vector<4x128xf32> to vector<4x32xf32>
    %16 = math.tanh %15 : vector<4x32xf32>
    %17 = vector.extract_strided_slice %8 {offsets = [0, 64], sizes = [4, 32], strides = [1, 1]} : vector<4x128xf32> to vector<4x32xf32>
    %18 = arith.negf %17 : vector<4x32xf32>
    %19 = math.exp %18 : vector<4x32xf32>
    %cst_8 = arith.constant 1.000000e+00 : f32
    %20 = vector.broadcast %cst_8 : f32 to vector<4x32xf32>
    %21 = arith.addf %20, %19 : vector<4x32xf32>
    %22 = arith.divf %20, %21 : vector<4x32xf32>
    %23 = arith.mulf %14, %16 : vector<4x32xf32>
    %24 = math.tanh %23 : vector<4x32xf32>
    %25 = arith.mulf %22, %24 : vector<4x32xf32>
    %c1 = arith.constant 1 : index
    %c0_9 = arith.constant 0 : index
    %c0_10 = arith.constant 0 : index
    %26 = vector.load %arg1[%c1, %c0_9, %c0_10] : memref<4x32x128xf32, #tpu.memory_space<vmem>>, vector<1x32x128xf32>
    %27 = vector.shape_cast %26 : vector<1x32x128xf32> to vector<32x128xf32>
    %cst_11 = arith.constant dense<0.000000e+00> : vector<4x128xf32>
    %28 = tpu.matmul %25, %27, %cst_11 {dimension_numbers = #tpu.dot_dimension_numbers<[1], [0], [0], [1], [0, 0, 1, 1], [], []>} : vector<4x32xf32>, vector<32x128xf32>, vector<4x128xf32> -> vector<4x128xf32>
    %c1_12 = arith.constant 1 : index
    %c0_13 = arith.constant 0 : index
    %c0_14 = arith.constant 0 : index
    %29 = vector.load %arg2[%c1_12, %c0_13, %c0_14] : memref<4x1x128xf32, #tpu.memory_space<vmem>>, vector<1x1x128xf32>
    %30 = vector.shape_cast %29 : vector<1x1x128xf32> to vector<1x128xf32>
    %31 = vector.broadcast %30 : vector<1x128xf32> to vector<4x128xf32>
    %32 = arith.addf %28, %31 : vector<4x128xf32>
    %33 = vector.extract_strided_slice %32 {offsets = [0, 0], sizes = [4, 32], strides = [1, 1]} : vector<4x128xf32> to vector<4x32xf32>
    %34 = arith.negf %33 : vector<4x32xf32>
    %35 = math.exp %34 : vector<4x32xf32>
    %cst_15 = arith.constant 1.000000e+00 : f32
    %36 = vector.broadcast %cst_15 : f32 to vector<4x32xf32>
    %37 = arith.addf %36, %35 : vector<4x32xf32>
    %38 = arith.divf %36, %37 : vector<4x32xf32>
    %39 = vector.extract_strided_slice %32 {offsets = [0, 32], sizes = [4, 32], strides = [1, 1]} : vector<4x128xf32> to vector<4x32xf32>
    %40 = math.tanh %39 : vector<4x32xf32>
    %41 = vector.extract_strided_slice %32 {offsets = [0, 64], sizes = [4, 32], strides = [1, 1]} : vector<4x128xf32> to vector<4x32xf32>
    %42 = arith.negf %41 : vector<4x32xf32>
    %43 = math.exp %42 : vector<4x32xf32>
    %cst_16 = arith.constant 1.000000e+00 : f32
    %44 = vector.broadcast %cst_16 : f32 to vector<4x32xf32>
    %45 = arith.addf %44, %43 : vector<4x32xf32>
    %46 = arith.divf %44, %45 : vector<4x32xf32>
    %47 = arith.mulf %38, %40 : vector<4x32xf32>
    %48 = math.tanh %47 : vector<4x32xf32>
    %49 = arith.mulf %46, %48 : vector<4x32xf32>
    %c2 = arith.constant 2 : index
    %c0_17 = arith.constant 0 : index
    %c0_18 = arith.constant 0 : index
    %50 = vector.load %arg1[%c2, %c0_17, %c0_18] : memref<4x32x128xf32, #tpu.memory_space<vmem>>, vector<1x32x128xf32>
    %51 = vector.shape_cast %50 : vector<1x32x128xf32> to vector<32x128xf32>
    %cst_19 = arith.constant dense<0.000000e+00> : vector<4x128xf32>
    %52 = tpu.matmul %49, %51, %cst_19 {dimension_numbers = #tpu.dot_dimension_numbers<[1], [0], [0], [1], [0, 0, 1, 1], [], []>} : vector<4x32xf32>, vector<32x128xf32>, vector<4x128xf32> -> vector<4x128xf32>
    %c2_20 = arith.constant 2 : index
    %c0_21 = arith.constant 0 : index
    %c0_22 = arith.constant 0 : index
    %53 = vector.load %arg2[%c2_20, %c0_21, %c0_22] : memref<4x1x128xf32, #tpu.memory_space<vmem>>, vector<1x1x128xf32>
    %54 = vector.shape_cast %53 : vector<1x1x128xf32> to vector<1x128xf32>
    %55 = vector.broadcast %54 : vector<1x128xf32> to vector<4x128xf32>
    %56 = arith.addf %52, %55 : vector<4x128xf32>
    %57 = vector.extract_strided_slice %56 {offsets = [0, 0], sizes = [4, 16], strides = [1, 1]} : vector<4x128xf32> to vector<4x16xf32>
    %58 = arith.negf %57 : vector<4x16xf32>
    %59 = math.exp %58 : vector<4x16xf32>
    %cst_23 = arith.constant 1.000000e+00 : f32
    %60 = vector.broadcast %cst_23 : f32 to vector<4x16xf32>
    %61 = arith.addf %60, %59 : vector<4x16xf32>
    %62 = arith.divf %60, %61 : vector<4x16xf32>
    %63 = vector.extract_strided_slice %56 {offsets = [0, 16], sizes = [4, 16], strides = [1, 1]} : vector<4x128xf32> to vector<4x16xf32>
    %64 = math.tanh %63 : vector<4x16xf32>
    %65 = vector.extract_strided_slice %56 {offsets = [0, 32], sizes = [4, 16], strides = [1, 1]} : vector<4x128xf32> to vector<4x16xf32>
    %66 = arith.negf %65 : vector<4x16xf32>
    %67 = math.exp %66 : vector<4x16xf32>
    %cst_24 = arith.constant 1.000000e+00 : f32
    %68 = vector.broadcast %cst_24 : f32 to vector<4x16xf32>
    %69 = arith.addf %68, %67 : vector<4x16xf32>
    %70 = arith.divf %68, %69 : vector<4x16xf32>
    %71 = arith.mulf %62, %64 : vector<4x16xf32>
    %72 = math.tanh %71 : vector<4x16xf32>
    %73 = arith.mulf %70, %72 : vector<4x16xf32>
    %c3 = arith.constant 3 : index
    %c0_25 = arith.constant 0 : index
    %c0_26 = arith.constant 0 : index
    %74 = vector.load %arg1[%c3, %c0_25, %c0_26] : memref<4x32x128xf32, #tpu.memory_space<vmem>>, vector<1x32x128xf32>
    %75 = vector.shape_cast %74 : vector<1x32x128xf32> to vector<32x128xf32>
    %76 = vector.extract_strided_slice %75 {offsets = [0, 0], sizes = [16, 128], strides = [1, 1]} : vector<32x128xf32> to vector<16x128xf32>
    %cst_27 = arith.constant dense<0.000000e+00> : vector<4x128xf32>
    %77 = tpu.matmul %73, %76, %cst_27 {dimension_numbers = #tpu.dot_dimension_numbers<[1], [0], [0], [1], [0, 0, 1, 1], [], []>} : vector<4x16xf32>, vector<16x128xf32>, vector<4x128xf32> -> vector<4x128xf32>
    %c3_28 = arith.constant 3 : index
    %c0_29 = arith.constant 0 : index
    %c0_30 = arith.constant 0 : index
    %78 = vector.load %arg2[%c3_28, %c0_29, %c0_30] : memref<4x1x128xf32, #tpu.memory_space<vmem>>, vector<1x1x128xf32>
    %79 = vector.shape_cast %78 : vector<1x1x128xf32> to vector<1x128xf32>
    %80 = vector.broadcast %79 : vector<1x128xf32> to vector<4x128xf32>
    %81 = arith.addf %77, %80 : vector<4x128xf32>
    %82 = vector.extract_strided_slice %81 {offsets = [0, 0], sizes = [4, 16], strides = [1, 1]} : vector<4x128xf32> to vector<4x16xf32>
    %83 = arith.negf %82 : vector<4x16xf32>
    %84 = math.exp %83 : vector<4x16xf32>
    %cst_31 = arith.constant 1.000000e+00 : f32
    %85 = vector.broadcast %cst_31 : f32 to vector<4x16xf32>
    %86 = arith.addf %85, %84 : vector<4x16xf32>
    %87 = arith.divf %85, %86 : vector<4x16xf32>
    %88 = vector.extract_strided_slice %81 {offsets = [0, 16], sizes = [4, 16], strides = [1, 1]} : vector<4x128xf32> to vector<4x16xf32>
    %89 = math.tanh %88 : vector<4x16xf32>
    %90 = vector.extract_strided_slice %81 {offsets = [0, 32], sizes = [4, 16], strides = [1, 1]} : vector<4x128xf32> to vector<4x16xf32>
    %91 = arith.negf %90 : vector<4x16xf32>
    %92 = math.exp %91 : vector<4x16xf32>
    %cst_32 = arith.constant 1.000000e+00 : f32
    %93 = vector.broadcast %cst_32 : f32 to vector<4x16xf32>
    %94 = arith.addf %93, %92 : vector<4x16xf32>
    %95 = arith.divf %93, %94 : vector<4x16xf32>
    %96 = arith.mulf %87, %89 : vector<4x16xf32>
    %97 = math.tanh %96 : vector<4x16xf32>
    %98 = arith.mulf %95, %97 : vector<4x16xf32>
    %c0_33 = arith.constant 0 : index
    %c0_34 = arith.constant 0 : index
    %99 = vector.load %arg3[%c0_33, %c0_34] : memref<4x16xf32, #tpu.memory_space<vmem>>, vector<4x16xf32>
    tpu.vector_store %arg3[%c0_33, %c0_34], %98 {strides = array<i32>} : memref<4x16xf32, #tpu.memory_space<vmem>>, vector<4x16xf32>,
    return
  }
}

</mosaic_0001>

<llo_original>
// kernel: tpu_custom_call.1
$region0: #{tpu_custom_call.1}
  #allocation0 [shape = 'u32[]', space=smem, size = 0x4, offset = 0x4, fixed_abs, tag = 'smem constant byte address 0x4 - core index']
  #allocation1 [shape = 'u32[144,128]{1,0:T(1,128)}', space=vmem, size = 0x12000, scoped, tag = 'internal scratch']
  %s0 = inlined_call_operand.hbm [shape: f32[4,16], index: 0, kind: input, shape index: {}]
  %s1 = inlined_call_operand.hbm [shape: f32[4,32,128], index: 1, kind: input, shape index: {}]
  %s2 = inlined_call_operand.vmem [shape: f32[4,1,128], index: 2, kind: input, shape index: {}]
  %s3 = inlined_call_operand.hbm [shape: f32[4,16], index: 3, kind: output, shape index: {}]
  %s4 = sld [smem:[#allocation0]]
  $region30: #{tpu_custom_call.1} parent=0
    _
  %s6 = ssub.s32 1, %s4
  %s7 = scalar_select 0, %s6, %s4
  $region1: #{tpu_custom_call.1} parent=0
    #allocation2 [shape = 'u8[2048]{0}', space=vmem, size = 0x800, scoped, tag = 'input window, operand 0, single buffered']
    #allocation3 [shape = 's32[1]{0}', space=sflag, size = 0x4, scoped, tag = 'scoped memory for tpu_custom_call.1']
    #allocation4 [shape = 's32[1]{0}', space=sflag, size = 0x4, scoped, tag = 'scoped memory for tpu_custom_call.1']
    #allocation5 [shape = 'u8[65536]{0}', space=vmem, size = 0x10000, scoped, tag = 'input window, operand 1, single buffered']
    #allocation6 [shape = 's32[1]{0}', space=sflag, size = 0x4, scoped, tag = 'scoped memory for tpu_custom_call.1']
    #allocation7 [shape = 'u8[2048]{0}', space=vmem, size = 0x800, scoped, tag = 'output window, operand 0, single buffered']
    %8 = vsyncpa [#allocation3], 0
    %9 = vsyncpa [#allocation6], 0
    %10 = vsyncpa [#allocation4], 0
    // Predicated region
    $region2: #{tpu_custom_call.1} parent=1 // pred_check
      _
    $region3: #{tpu_custom_call.1} parent=1 // pred_check_branch
      %12 = sbr.rel (0) target = $region5
    $region4: #{tpu_custom_call.1} parent=1 // pred_region
      %s14 = ssub.s32 64, 64
      %15 = vsyncadd [#allocation3], %s14
      %s17 = sshll.u32 [#allocation2], 4
      %s18 = int_to_ptr.vmem [resolvable:$true] %s17
      %20 = dma.hbm_to_vmem [thread:$0]  %s0, 64, %s18, [#allocation3]
    $region5: #{tpu_custom_call.1} parent=1 // pred_fallthru
      _
    // Predicated region
    $region6: #{tpu_custom_call.1} parent=1 // pred_check
      _
    $region7: #{tpu_custom_call.1} parent=1 // pred_check_branch
      %22 = sbr.rel (0) target = $region9
    $region8: #{tpu_custom_call.1} parent=1 // pred_region
      %s24 = ssub.s32 2048, 2048
      %25 = vsyncadd [#allocation6], %s24
      %s26 = sshll.u32 [#allocation5], 4
      %s27 = int_to_ptr.vmem [resolvable:$true] %s26
      %32 = dma.hbm_to_vmem [thread:$0]  %s1, 2048, %s27, [#allocation6], 128, 128, 8
    $region9: #{tpu_custom_call.1} parent=1 // pred_fallthru
      _
    // Predicated region
    $region10: #{tpu_custom_call.1} parent=1 // pred_check
      _
    $region11: #{tpu_custom_call.1} parent=1 // pred_check_branch
      %34 = sbr.rel (0) target = $region13
    $region12: #{tpu_custom_call.1} parent=1 // pred_region
      _
    $region13: #{tpu_custom_call.1} parent=1 // pred_fallthru
      _
    // Predicated region
    $region14: #{tpu_custom_call.1} parent=1 // pred_check
      _
    $region15: #{tpu_custom_call.1} parent=1 // pred_check_branch
      %36 = sbr.rel (0) target = $region17
    $region16: #{tpu_custom_call.1} parent=1 // pred_region
      %37 = dma.done [#allocation3], 64
    $region17: #{tpu_custom_call.1} parent=1 // pred_fallthru
      _
    // Predicated region
    $region18: #{tpu_custom_call.1} parent=1 // pred_check
      _
    $region19: #{tpu_custom_call.1} parent=1 // pred_check_branch
      %39 = sbr.rel (0) target = $region21
    $region20: #{tpu_custom_call.1} parent=1 // pred_region
      %40 = dma.done [#allocation6], 2048
    $region21: #{tpu_custom_call.1} parent=1 // pred_fallthru
      _
    %v41 = vld [vmem:[#allocation2] sm:$0xf]
    %v42 = vld [vmem:[#allocation5] sm:$0xff]
    %v43 = vld [vmem:[#allocation5 + $0x8] sm:$0xff]
    %v44 = vld [vmem:[%s2] sm:$0x1]
    %v46 = vlaneseq
    %v47 = vshrl.u32 %v46, 7
    %v48 = vsub.s32 0, %v47
    %v49 = vrot.slane %v44, %v48
    %vm51 = vcmask 130048
    %v53 = vsel %vm51, %v41, 0
    %55 = vmatprep.subr.mxu0 0.0
    %56 = vmatpush1.msra.mxu0 %v42
    %57 = vmatprep.subr.mxu0 0.0
    %58 = vmatpush1.msra.mxu0 %v43
    %59 = vmatprep.subr.mxu0 0.0
    %60 = vmatpush1.msra.mxu0 0.0
    %61 = vmatprep.subr.mxu0 0.0
    %62 = vmatpush1.msra.mxu0 0.0
    %63 = vmatprep.subr.mxu0 0.0
    %64 = vmatpush1.msra.mxu0 0.0
    %65 = vmatprep.subr.mxu0 0.0
    %66 = vmatpush1.msra.mxu0 0.0
    %67 = vmatprep.subr.mxu0 0.0
    %68 = vmatpush1.msra.mxu0 0.0
    %69 = vmatprep.subr.mxu0 0.0
    %70 = vmatpush1.msra.mxu0 0.0
    %71 = vmatprep.subr.mxu0 0.0
    %72 = vmatpush1.msra.mxu0 0.0
    %73 = vmatprep.subr.mxu0 0.0
    %74 = vmatpush1.msra.mxu0 0.0
    %75 = vmatprep.subr.mxu0 0.0
    %76 = vmatpush1.msra.mxu0 0.0
    %77 = vmatprep.subr.mxu0 0.0
    %78 = vmatpush1.msra.mxu0 0.0
    %79 = vmatprep.subr.mxu0 0.0
    %80 = vmatpush1.msra.mxu0 0.0
    %81 = vmatprep.subr.mxu0 0.0
    %82 = vmatpush1.msra.mxu0 0.0
    %83 = vmatprep.subr.mxu0 0.0
    %84 = vmatpush1.msra.mxu0 0.0
    %85 = vmatprep.subr.mxu0 0.0
    %86 = vmatpush1.msra.mxu0 0.0
    %87 = vmatprep.subr.mxu0 0.0
    %88 = vmatpush1.msra.mxu0 0.0
    %89 = vmatprep.subr.mxu0 0.0
    %90 = vmatpush1.msra.mxu0 0.0
    %91 = vmatprep.subr.mxu0 0.0
    %92 = vmatpush1.msra.mxu0 0.0
    %93 = vmatprep.subr.mxu0 0.0
    %94 = vmatpush1.msra.mxu0 0.0
    %95 = vmatprep.subr.mxu0 0.0
    %96 = vmatpush1.msra.mxu0 0.0
    %97 = vmatprep.subr.mxu0 0.0
    %98 = vmatpush1.msra.mxu0 0.0
    %99 = vmatprep.subr.mxu0 0.0
    %100 = vmatpush1.msra.mxu0 0.0
    %101 = vmatprep.subr.mxu0 0.0
    %102 = vmatpush1.msra.mxu0 0.0
    %103 = vmatprep.subr.mxu0 0.0
    %104 = vmatpush1.msra.mxu0 0.0
    %105 = vmatprep.subr.mxu0 0.0
    %106 = vmatpush1.msra.mxu0 0.0
    %107 = vmatprep.subr.mxu0 0.0
    %108 = vmatpush1.msra.mxu0 0.0
    %109 = vmatprep.subr.mxu0 0.0
    %110 = vmatpush1.msra.mxu0 0.0
    %111 = vmatprep.subr.mxu0 0.0
    %112 = vmatpush1.msra.mxu0 0.0
    %113 = vmatprep.subr.mxu0 0.0
    %114 = vmatpush1.msra.mxu0 0.0
    %115 = vmatprep.subr.mxu0 0.0
    %116 = vmatpush1.msra.mxu0 0.0
    %117 = vmatprep.subr.mxu0 0.0
    %118 = vmatpush1.msra.mxu0 0.0
    %119 = vmatprep.mubr.f32.mxu0 0.0
    %120 = vmatmul.mubr.f32.gmra.mrb[0].mxu0 %v53
    %v121 = vpop.f32.mrb[0].mxu0
    %v122 = vadd.f32 %v49, %v121
    %v123 = vpop.f32.mrb[0].mxu0
    %124 = vdwg.mxu0
    %v125 = vxor.u32 %v122, 2147483648
    %v126 = vmul.f32 %v125, 1.442695
    %v127 = vpow.pop %v126
    %v128 = vadd.f32 %v127, 1.0
    %v129 = vrcp.pop %v128
    %v130 = vmul.f32 1.0, %v129
    %v131 = vtanh.pop %v122
    %133 = vrot.lane.b32.xlu0 %v131, 96
    %v134 = vpop.permute.xlu0 %133
    %v136 = vmul.f32 %v130, %v134
    %v137 = vtanh.pop %v136
    %139 = vrot.lane.b32.xlu0 %v137, 64
    %v140 = vpop.permute.xlu0 %139
    %v142 = vmul.f32 %v130, %v140
    %s143 = scalar_lea.vmem [#allocation5], 32
    %v144 = vld [vmem:[%s143] sm:$0xff]
    %v145 = vld [vmem:[%s143 + $0x8] sm:$0xff]
    %v146 = vld [vmem:[%s143 + $0x10] sm:$0xff]
    %v147 = vld [vmem:[%s143 + $0x18] sm:$0xff]
    %s148 = scalar_lea.vmem %s2, 1
    %v149 = vld [vmem:[%s148] sm:$0x1]
    %v151 = vlaneseq
    %v152 = vshrl.u32 %v151, 7
    %v153 = vsub.s32 0, %v152
    %v154 = vrot.slane %v149, %v153
    %157 = vrot.lane.b32.xlu0 %v142, 64
    %v158 = vpop.permute.xlu0 %157
    %vm159 = vcmask 261120
    %v160 = vsel %vm159, %v158, 0
    %162 = vmatprep.subr.mxu0 0.0
    %163 = vmatpush1.msra.mxu0 %v144
    %164 = vmatprep.subr.mxu0 0.0
    %165 = vmatpush1.msra.mxu0 %v145
    %166 = vmatprep.subr.mxu0 0.0
    %167 = vmatpush1.msra.mxu0 %v146
    %168 = vmatprep.subr.mxu0 0.0
    %169 = vmatpush1.msra.mxu0 %v147
    %170 = vmatprep.subr.mxu0 0.0
    %171 = vmatpush1.msra.mxu0 0.0
    %172 = vmatprep.subr.mxu0 0.0
    %173 = vmatpush1.msra.mxu0 0.0
    %174 = vmatprep.subr.mxu0 0.0
    %175 = vmatpush1.msra.mxu0 0.0
    %176 = vmatprep.subr.mxu0 0.0
    %177 = vmatpush1.msra.mxu0 0.0
    %178 = vmatprep.subr.mxu0 0.0
    %179 = vmatpush1.msra.mxu0 0.0
    %180 = vmatprep.subr.mxu0 0.0
    %181 = vmatpush1.msra.mxu0 0.0
    %182 = vmatprep.subr.mxu0 0.0
    %183 = vmatpush1.msra.mxu0 0.0
    %184 = vmatprep.subr.mxu0 0.0
    %185 = vmatpush1.msra.mxu0 0.0
    %186 = vmatprep.subr.mxu0 0.0
    %187 = vmatpush1.msra.mxu0 0.0
    %188 = vmatprep.subr.mxu0 0.0
    %189 = vmatpush1.msra.mxu0 0.0
    %190 = vmatprep.subr.mxu0 0.0
    %191 = vmatpush1.msra.mxu0 0.0
    %192 = vmatprep.subr.mxu0 0.0
    %193 = vmatpush1.msra.mxu0 0.0
    %194 = vmatprep.subr.mxu0 0.0
    %195 = vmatpush1.msra.mxu0 0.0
    %196 = vmatprep.subr.mxu0 0.0
    %197 = vmatpush1.msra.mxu0 0.0
    %198 = vmatprep.subr.mxu0 0.0
    %199 = vmatpush1.msra.mxu0 0.0
    %200 = vmatprep.subr.mxu0 0.0
    %201 = vmatpush1.msra.mxu0 0.0
    %202 = vmatprep.subr.mxu0 0.0
    %203 = vmatpush1.msra.mxu0 0.0
    %204 = vmatprep.subr.mxu0 0.0
    %205 = vmatpush1.msra.mxu0 0.0
    %206 = vmatprep.subr.mxu0 0.0
    %207 = vmatpush1.msra.mxu0 0.0
    %208 = vmatprep.subr.mxu0 0.0
    %209 = vmatpush1.msra.mxu0 0.0
    %210 = vmatprep.subr.mxu0 0.0
    %211 = vmatpush1.msra.mxu0 0.0
    %212 = vmatprep.subr.mxu0 0.0
    %213 = vmatpush1.msra.mxu0 0.0
    %214 = vmatprep.subr.mxu0 0.0
    %215 = vmatpush1.msra.mxu0 0.0
    %216 = vmatprep.subr.mxu0 0.0
    %217 = vmatpush1.msra.mxu0 0.0
    %218 = vmatprep.subr.mxu0 0.0
    %219 = vmatpush1.msra.mxu0 0.0
    %220 = vmatprep.subr.mxu0 0.0
    %221 = vmatpush1.msra.mxu0 0.0
    %222 = vmatprep.subr.mxu0 0.0
    %223 = vmatpush1.msra.mxu0 0.0
    %224 = vmatprep.subr.mxu0 0.0
    %225 = vmatpush1.msra.mxu0 0.0
    %226 = vmatprep.mubr.f32.mxu0 0.0
    %227 = vmatmul.mubr.f32.gmra.mrb[0].mxu0 %v160
    %v228 = vpop.f32.mrb[0].mxu0
    %v229 = vadd.f32 %v154, %v228
    %v230 = vpop.f32.mrb[0].mxu0
    %231 = vdwg.mxu0
    %v232 = vxor.u32 %v229, 2147483648
    %v233 = vmul.f32 %v232, 1.442695
    %v234 = vpow.pop %v233
    %v235 = vadd.f32 %v234, 1.0
    %v236 = vrcp.pop %v235
    %v237 = vmul.f32 1.0, %v236
    %v238 = vtanh.pop %v229
    %240 = vrot.lane.b32.xlu0 %v238, 96
    %v241 = vpop.permute.xlu0 %240
    %v243 = vmul.f32 %v237, %v241
    %v244 = vtanh.pop %v243
    %246 = vrot.lane.b32.xlu0 %v244, 64
    %v247 = vpop.permute.xlu0 %246
    %v249 = vmul.f32 %v237, %v247
    %s250 = scalar_lea.vmem [#allocation5], 64
    %v251 = vld [vmem:[%s250] sm:$0xff]
    %v252 = vld [vmem:[%s250 + $0x8] sm:$0xff]
    %v253 = vld [vmem:[%s250 + $0x10] sm:$0xff]
    %v254 = vld [vmem:[%s250 + $0x18] sm:$0xff]
    %s255 = scalar_lea.vmem %s2, 2
    %v256 = vld [vmem:[%s255] sm:$0x1]
    %v258 = vlaneseq
    %v259 = vshrl.u32 %v258, 7
    %v260 = vsub.s32 0, %v259
    %v261 = vrot.slane %v256, %v260
    %264 = vrot.lane.b32.xlu0 %v249, 64
    %v265 = vpop.permute.xlu0 %264
    %v266 = vsel %vm159, %v265, 0
    %268 = vmatprep.subr.mxu0 0.0
    %269 = vmatpush1.msra.mxu0 %v251
    %270 = vmatprep.subr.mxu0 0.0
    %271 = vmatpush1.msra.mxu0 %v252
    %272 = vmatprep.subr.mxu0 0.0
    %273 = vmatpush1.msra.mxu0 %v253
    %274 = vmatprep.subr.mxu0 0.0
    %275 = vmatpush1.msra.mxu0 %v254
    %276 = vmatprep.subr.mxu0 0.0
    %277 = vmatpush1.msra.mxu0 0.0
    %278 = vmatprep.subr.mxu0 0.0
    %279 = vmatpush1.msra.mxu0 0.0
    %280 = vmatprep.subr.mxu0 0.0
    %281 = vmatpush1.msra.mxu0 0.0
    %282 = vmatprep.subr.mxu0 0.0
    %283 = vmatpush1.msra.mxu0 0.0
    %284 = vmatprep.subr.mxu0 0.0
    %285 = vmatpush1.msra.mxu0 0.0
    %286 = vmatprep.subr.mxu0 0.0
    %287 = vmatpush1.msra.mxu0 0.0
    %288 = vmatprep.subr.mxu0 0.0
    %289 = vmatpush1.msra.mxu0 0.0
    %290 = vmatprep.subr.mxu0 0.0
    %291 = vmatpush1.msra.mxu0 0.0
    %292 = vmatprep.subr.mxu0 0.0
    %293 = vmatpush1.msra.mxu0 0.0
    %294 = vmatprep.subr.mxu0 0.0
    %295 = vmatpush1.msra.mxu0 0.0
    %296 = vmatprep.subr.mxu0 0.0
    %297 = vmatpush1.msra.mxu0 0.0
    %298 = vmatprep.subr.mxu0 0.0
    %299 = vmatpush1.msra.mxu0 0.0
    %300 = vmatprep.subr.mxu0 0.0
    %301 = vmatpush1.msra.mxu0 0.0
    %302 = vmatprep.subr.mxu0 0.0
    %303 = vmatpush1.msra.mxu0 0.0
    %304 = vmatprep.subr.mxu0 0.0
    %305 = vmatpush1.msra.mxu0 0.0
    %306 = vmatprep.subr.mxu0 0.0
    %307 = vmatpush1.msra.mxu0 0.0
    %308 = vmatprep.subr.mxu0 0.0
    %309 = vmatpush1.msra.mxu0 0.0
    %310 = vmatprep.subr.mxu0 0.0
    %311 = vmatpush1.msra.mxu0 0.0
    %312 = vmatprep.subr.mxu0 0.0
    %313 = vmatpush1.msra.mxu0 0.0
    %314 = vmatprep.subr.mxu0 0.0
    %315 = vmatpush1.msra.mxu0 0.0
    %316 = vmatprep.subr.mxu0 0.0
    %317 = vmatpush1.msra.mxu0 0.0
    %318 = vmatprep.subr.mxu0 0.0
    %319 = vmatpush1.msra.mxu0 0.0
    %320 = vmatprep.subr.mxu0 0.0
    %321 = vmatpush1.msra.mxu0 0.0
    %322 = vmatprep.subr.mxu0 0.0
    %323 = vmatpush1.msra.mxu0 0.0
    %324 = vmatprep.subr.mxu0 0.0
    %325 = vmatpush1.msra.mxu0 0.0
    %326 = vmatprep.subr.mxu0 0.0
    %327 = vmatpush1.msra.mxu0 0.0
    %328 = vmatprep.subr.mxu0 0.0
    %329 = vmatpush1.msra.mxu0 0.0
    %330 = vmatprep.subr.mxu0 0.0
    %331 = vmatpush1.msra.mxu0 0.0
    %332 = vmatprep.mubr.f32.mxu0 0.0
    %333 = vmatmul.mubr.f32.gmra.mrb[0].mxu0 %v266
    %v334 = vpop.f32.mrb[0].mxu0
    %v335 = vadd.f32 %v261, %v334
    %v336 = vpop.f32.mrb[0].mxu0
    %337 = vdwg.mxu0
    %v338 = vxor.u32 %v335, 2147483648
    %v339 = vmul.f32 %v338, 1.442695
    %v340 = vpow.pop %v339
    %v341 = vadd.f32 %v340, 1.0
    %v342 = vrcp.pop %v341
    %v343 = vmul.f32 1.0, %v342
    %v344 = vtanh.pop %v335
    %346 = vrot.lane.b32.xlu0 %v344, 112
    %v347 = vpop.permute.xlu0 %346
    %v349 = vmul.f32 %v343, %v347
    %v350 = vtanh.pop %v349
    %352 = vrot.lane.b32.xlu0 %v350, 32
    %v353 = vpop.permute.xlu0 %352
    %v355 = vmul.f32 %v343, %v353
    %s356 = scalar_lea.vmem [#allocation5], 96
    %v357 = vld [vmem:[%s356] sm:$0xff]
    %v358 = vld [vmem:[%s356 + $0x8] sm:$0xff]
    %s359 = scalar_lea.vmem %s2, 3
    %v360 = vld [vmem:[%s359] sm:$0x1]
    %v362 = vlaneseq
    %v363 = vshrl.u32 %v362, 7
    %v364 = vsub.s32 0, %v363
    %v365 = vrot.slane %v360, %v364
    %368 = vrot.lane.b32.xlu0 %v355, 96
    %v369 = vpop.permute.xlu0 %368
    %v370 = vsel %vm51, %v369, 0
    %372 = vmatprep.subr.mxu0 0.0
    %373 = vmatpush1.msra.mxu0 %v357
    %374 = vmatprep.subr.mxu0 0.0
    %375 = vmatpush1.msra.mxu0 %v358
    %376 = vmatprep.subr.mxu0 0.0
    %377 = vmatpush1.msra.mxu0 0.0
    %378 = vmatprep.subr.mxu0 0.0
    %379 = vmatpush1.msra.mxu0 0.0
    %380 = vmatprep.subr.mxu0 0.0
    %381 = vmatpush1.msra.mxu0 0.0
    %382 = vmatprep.subr.mxu0 0.0
    %383 = vmatpush1.msra.mxu0 0.0
    %384 = vmatprep.subr.mxu0 0.0
    %385 = vmatpush1.msra.mxu0 0.0
    %386 = vmatprep.subr.mxu0 0.0
    %387 = vmatpush1.msra.mxu0 0.0
    %388 = vmatprep.subr.mxu0 0.0
    %389 = vmatpush1.msra.mxu0 0.0
    %390 = vmatprep.subr.mxu0 0.0
    %391 = vmatpush1.msra.mxu0 0.0
    %392 = vmatprep.subr.mxu0 0.0
    %393 = vmatpush1.msra.mxu0 0.0
    %394 = vmatprep.subr.mxu0 0.0
    %395 = vmatpush1.msra.mxu0 0.0
    %396 = vmatprep.subr.mxu0 0.0
    %397 = vmatpush1.msra.mxu0 0.0
    %398 = vmatprep.subr.mxu0 0.0
    %399 = vmatpush1.msra.mxu0 0.0
    %400 = vmatprep.subr.mxu0 0.0
    %401 = vmatpush1.msra.mxu0 0.0
    %402 = vmatprep.subr.mxu0 0.0
    %403 = vmatpush1.msra.mxu0 0.0
    %404 = vmatprep.subr.mxu0 0.0
    %405 = vmatpush1.msra.mxu0 0.0
    %406 = vmatprep.subr.mxu0 0.0
    %407 = vmatpush1.msra.mxu0 0.0
    %408 = vmatprep.subr.mxu0 0.0
    %409 = vmatpush1.msra.mxu0 0.0
    %410 = vmatprep.subr.mxu0 0.0
    %411 = vmatpush1.msra.mxu0 0.0
    %412 = vmatprep.subr.mxu0 0.0
    %413 = vmatpush1.msra.mxu0 0.0
    %414 = vmatprep.subr.mxu0 0.0
    %415 = vmatpush1.msra.mxu0 0.0
    %416 = vmatprep.subr.mxu0 0.0
    %417 = vmatpush1.msra.mxu0 0.0
    %418 = vmatprep.subr.mxu0 0.0
    %419 = vmatpush1.msra.mxu0 0.0
    %420 = vmatprep.subr.mxu0 0.0
    %421 = vmatpush1.msra.mxu0 0.0
    %422 = vmatprep.subr.mxu0 0.0
    %423 = vmatpush1.msra.mxu0 0.0
    %424 = vmatprep.subr.mxu0 0.0
    %425 = vmatpush1.msra.mxu0 0.0
    %426 = vmatprep.subr.mxu0 0.0
    %427 = vmatpush1.msra.mxu0 0.0
    %428 = vmatprep.subr.mxu0 0.0
    %429 = vmatpush1.msra.mxu0 0.0
    %430 = vmatprep.subr.mxu0 0.0
    %431 = vmatpush1.msra.mxu0 0.0
    %432 = vmatprep.subr.mxu0 0.0
    %433 = vmatpush1.msra.mxu0 0.0
    %434 = vmatprep.subr.mxu0 0.0
    %435 = vmatpush1.msra.mxu0 0.0
    %436 = vmatprep.mubr.f32.mxu0 0.0
    %437 = vmatmul.mubr.f32.gmra.mrb[0].mxu0 %v370
    %v438 = vpop.f32.mrb[0].mxu0
    %v439 = vadd.f32 %v365, %v438
    %v440 = vpop.f32.mrb[0].mxu0
    %441 = vdwg.mxu0
    %v442 = vxor.u32 %v439, 2147483648
    %v443 = vmul.f32 %v442, 1.442695
    %v444 = vpow.pop %v443
    %v445 = vadd.f32 %v444, 1.0
    %v446 = vrcp.pop %v445
    %v447 = vmul.f32 1.0, %v446
    %v448 = vtanh.pop %v439
    %450 = vrot.lane.b32.xlu0 %v448, 112
    %v451 = vpop.permute.xlu0 %450
    %v453 = vmul.f32 %v447, %v451
    %v454 = vtanh.pop %v453
    %456 = vrot.lane.b32.xlu0 %v454, 32
    %v457 = vpop.permute.xlu0 %456
    %v459 = vmul.f32 %v447, %v457
    %461 = vrot.lane.b32.xlu0 %v459, 96
    %v462 = vpop.permute.xlu0 %461
    %vm464 = vcmask 125952
    %465 = vst.msk [vmem:[#allocation7] sm:$0xf] %vm464, %v462
    // Predicated region
    $region22: #{tpu_custom_call.1} parent=1 // pred_check
      _
    $region23: #{tpu_custom_call.1} parent=1 // pred_check_branch
      %467 = sbr.rel (0) target = $region25
    $region24: #{tpu_custom_call.1} parent=1 // pred_region
      %s469 = ssub.s32 64, 64
      %470 = vsyncadd [#allocation4], %s469
      %s472 = sshll.u32 [#allocation7], 4
      %s473 = int_to_ptr.vmem [resolvable:$true] %s472
      %475 = dma.vmem_to_hbm [thread:$0]  %s473, 64, %s3, [#allocation4]
    $region25: #{tpu_custom_call.1} parent=1 // pred_fallthru
      _
    // Predicated region
    $region26: #{tpu_custom_call.1} parent=1 // pred_check
      _
    $region27: #{tpu_custom_call.1} parent=1 // pred_check_branch
      %477 = sbr.rel (0) target = $region29
    $region28: #{tpu_custom_call.1} parent=1 // pred_region
      %478 = dma.done [#allocation4], 64
    $region29: #{tpu_custom_call.1} parent=1 // pred_fallthru
      _
    %479 = vsyncpa [#allocation3], 1
    %480 = vsyncpa [#allocation6], 1
    %481 = vsyncpa [#allocation4], 1

</llo_original>
